<compile_context>
chip_gen: v5e
topology: v5e:2x2
jax: 0.10.0
libtpu: 0.0.40
codegen_flags: <defaults>
</compile_context>

<pallas_src>
import functools

import jax
import jax.numpy as jnp
from jax.experimental import pallas as pl
from jax.experimental.pallas import tpu as pltpu


# ----------------------------- helpers --------------------------------------

def _round_up(x, m):
    return ((x + m - 1) // m) * m


@functools.lru_cache(maxsize=None)
def _vmem_limits():
    """(vmem_limit_bytes, tile_chooser_budget) — generation aware."""
    cap = 64 * 1024 * 1024                       # conservative default (v7x per-TC)
    try:
        info = pltpu.get_tpu_info()
        cap = int(getattr(info, "vmem_capacity_bytes", cap)) or cap
    except Exception:
        pass
    limit = min(int(cap * 0.85), 112 * 1024 * 1024)   # leave compiler headroom
    budget = int(limit * 0.80)                         # explicit-buffer budget
    return limit, budget


def _resident_block_spec(block_shape, index_map):
    """Single-buffered BlockSpec for grid-invariant (constant index) operands."""
    try:
        return pl.BlockSpec(block_shape, index_map, pipeline_mode=pl.Buffered(1))
    except TypeError:            # pipeline_mode kwarg unavailable -> default (still correct)
        return pl.BlockSpec(block_shape, index_map)


_TM_CANDIDATES = (8192, 4096, 2048, 1024, 512, 256, 128, 64, 32, 16)


def _fits_resident(tm, K, E, out_bytes, budget):
    resident = K * E * 2 + E * 4                           # W (bf16) + bias (f32), 1-buffered
    per_tile = 2 * tm * K * 2 + 2 * tm * E * out_bytes     # double-buffered X + output
    return resident + per_tile <= budget


def _choose_tm(M, K, E, out_bytes, budget):
    """Largest VMEM-fitting row tile (multiple of 16); None => K-tiled fallback."""
    if not _fits_resident(16, K, E, out_bytes, budget):
        return None
    m_cap = _round_up(M, 16)
    cands = [tm for tm in _TM_CANDIDATES
             if tm <= m_cap and _fits_resident(tm, K, E, out_bytes, budget)]
    if not cands:
        return 16
    # Prefer >=2 grid steps only when each tile still has >=128 rows (lets the
    # 'parallel' M axis shard across v7x's 2 TCs); otherwise take the biggest tile.
    for tm in cands:
        if tm >= 128 and pl.cdiv(M, tm) >= 2:
            return tm
    return cands[0]


def _choose_tiles_ktiled(M, K, E, out_bytes, budget):
    m_cap = _round_up(M, 16)
    for tm in (2048, 1024, 512, 256, 128, 64, 32, 16):     # bigger tm => fewer W re-reads
        if tm > m_cap:
            continue
        for tk in (4096, 2048, 1024, 512, 256, 128):
            fp = (2 * tm * tk * 2            # X tile, double-buffered bf16
                  + 2 * tk * E * 2           # W tile, double-buffered bf16
                  + E * 4                    # bias, resident
                  + 2 * tm * E * out_bytes   # output tile
                  + tm * E * 4)              # f32 accumulator scratch
            if fp <= budget:
                return tm, tk
    return 16, 128


# ----------------------------- Pallas kernels -------------------------------

def _pe_kernel_resident(x_ref, w_ref, b_ref, o_ref):
    """o = x @ W + b for one (tm, K) row tile; W and bias are VMEM-resident."""
    acc = jnp.dot(x_ref[...], w_ref[...], preferred_element_type=jnp.float32)
    o_ref[...] = (acc + b_ref[...]).astype(o_ref.dtype)


def _pe_kernel_ktiled(x_ref, w_ref, b_ref, o_ref, acc_ref):
    """K-tiled variant: f32 accumulator across the 'arbitrary' K axis."""
    k = pl.program_id(1)

    @pl.when(k == 0)
    def _():
        acc_ref[...] = jnp.zeros_like(acc_ref)

    acc_ref[...] += jnp.dot(x_ref[...], w_ref[...],
                            preferred_element_type=jnp.float32)

    @pl.when(k == pl.num_programs(1) - 1)
    def _():
        o_ref[...] = (acc_ref[...] + b_ref[...]).astype(o_ref.dtype)


def _matmul_bias(x_p, w, b2, out_dtype):
    """x_p:(M,K) bf16, w:(K,E) bf16, b2:(1,E) f32  ->  (M,E) out_dtype."""
    M, K = x_p.shape
    _, E = w.shape
    out_bytes = jnp.dtype(out_dtype).itemsize
    vmem_limit, budget = _vmem_limits()

    tm = _choose_tm(M, K, E, out_bytes, budget)
    if tm is not None:
        # Fast path: resident W/bias, single dot per grid step, no K axis.
        return pl.pallas_call(
            _pe_kernel_resident,
            out_shape=jax.ShapeDtypeStruct((M, E), out_dtype),
            grid_spec=pltpu.PrefetchScalarGridSpec(
                num_scalar_prefetch=0,
                grid=(pl.cdiv(M, tm),),                 # Pallas masks the boundary block
                in_specs=[
                    pl.BlockSpec((tm, K), lambda i: (i, 0)),           # X row tile
                    _resident_block_spec((K, E), lambda i: (0, 0)),    # W: 1 DMA, 1 buffer
                    _resident_block_spec((1, E), lambda i: (0, 0)),    # bias: resident
                ],
                out_specs=pl.BlockSpec((tm, E), lambda i: (i, 0)),
            ),
            compiler_params=pltpu.CompilerParams(
                dimension_semantics=("parallel",),
                vmem_limit_bytes=vmem_limit,
            ),
        )(x_p, w, b2)

    # Fallback for large K*E: K grid axis + f32 accumulator scratch.
    tm, tk = _choose_tiles_ktiled(M, K, E, out_bytes, budget)
    k_pad = pl.cdiv(K, tk) * tk
    if k_pad != K:
        # Zero-pad the reduction dim (zeros contribute nothing to the dot).
        x_p = jnp.pad(x_p, ((0, 0), (0, k_pad - K)))
        w = jnp.pad(w, ((0, k_pad - K), (0, 0)))
    return pl.pallas_call(
        _pe_kernel_ktiled,
        out_shape=jax.ShapeDtypeStruct((M, E), out_dtype),
        grid_spec=pltpu.PrefetchScalarGridSpec(
            num_scalar_prefetch=0,
            grid=(pl.cdiv(M, tm), k_pad // tk),
            in_specs=[
                pl.BlockSpec((tm, tk), lambda i, k: (i, k)),
                pl.BlockSpec((tk, E), lambda i, k: (k, 0)),
                _resident_block_spec((1, E), lambda i, k: (0, 0)),
            ],
            out_specs=pl.BlockSpec((tm, E), lambda i, k: (i, 0)),
            scratch_shapes=[pltpu.VMEM((tm, E), jnp.float32)],
        ),
        compiler_params=pltpu.CompilerParams(
            dimension_semantics=("parallel", "arbitrary"),
            vmem_limit_bytes=vmem_limit,
        ),
    )(x_p, w, b2)


# ----------------------------- Module wrapper -------------------------------

class PatchEmbedPallas:
    def __init__(self, img_size=16, patch_size=8, in_chans=1, embed_dim=128,
                 out_dtype=None, key=jax.random.PRNGKey(0)):
        img_size = (img_size,) * 3 if isinstance(img_size, int) else tuple(img_size)
        patch_size = (patch_size,) * 3 if isinstance(patch_size, int) else tuple(patch_size)
        self.img_size = img_size
        self.patch_size = patch_size
        self.in_chans = in_chans
        self.embed_dim = embed_dim
        self.out_dtype = out_dtype      # None -> follow input dtype (e.g. bf16 downstream)
        self.grid_size = tuple(img_size[i] // patch_size[i] for i in range(3))
        self.num_patches = self.grid_size[0] * self.grid_size[1] * self.grid_size[2]

        pt, ph, pw = patch_size
        fan_in = in_chans * pt * ph * pw
        self.fan_in = fan_in
        kw_, kb_ = jax.random.split(key)
        # Deterministic init mimicking Conv3d uniform(-1/sqrt(fan_in), 1/sqrt(fan_in)).
        bound = 1.0 / jnp.sqrt(jnp.float32(fan_in))
        # PyTorch Conv3d weight layout: (embed_dim, in_chans, pt, ph, pw).
        self.weight = jax.random.uniform(
            kw_, (embed_dim, in_chans, pt, ph, pw), jnp.float32, -bound, bound)
        self.bias = jax.random.uniform(kb_, (embed_dim,), jnp.float32, -bound, bound)

        # Flattened matmul weight (K, E); K flattened in (c, kt, kh, kw) order to
        # match _extract_patches (one-time host-side reshuffle).
        self.w_mat = self.weight.reshape(embed_dim, fan_in).T      # f32 master copy
        self.w_mat_bf16 = self.w_mat.astype(jnp.bfloat16)          # kernel operand
        self.bias2 = self.bias.reshape(1, embed_dim)               # f32 bias row

    def _extract_patches(self, x):
        # x: (N, C, D, H, W) [NCDHW, as in PyTorch]. One fused XLA
        # reshape+transpose; the upstream f32->bf16 cast fuses into it so X is
        # read once and X_p written once, in bf16.
        # TODO(synk): eliminate the X_p HBM round trip by gridding over (N,t,h),
        # DMA-ing rectangular (1,C,pt,ph,W) NCDHW slabs via BlockSpec and doing
        # the (c,kt,kh,kw) relayout in VMEM — kept in the wrapper for now since
        # that gather is not a rectangular tiling and an in-kernel 7-D relayout
        # risks Mosaic lowering failures.
        N, C, D, H, W = x.shape
        t, h, w = self.grid_size
        pt, ph, pw = self.patch_size
        xp = x.reshape(N, C, t, pt, h, ph, w, pw)
        # -> (N, t, h, w, C, pt, ph, pw): row = one patch, flattened (c, kt, kh, kw).
        xp = jnp.transpose(xp, (0, 2, 4, 6, 1, 3, 5, 7))
        return xp.reshape(N * t * h * w, C * pt * ph * pw)

    @functools.partial(jax.jit, static_argnums=0)
    def __call__(self, x):
        N = x.shape[0]
        out_dtype = self.out_dtype if self.out_dtype is not None else x.dtype
        x_p = self._extract_patches(x.astype(jnp.bfloat16))        # (M, K) bf16
        out = _matmul_bias(x_p, self.w_mat_bf16, self.bias2, out_dtype)
        return out.reshape(N, self.num_patches, self.embed_dim)


# --------------------------------- main --------------------------------------

if __name__ == "__main__":
    key = jax.random.PRNGKey(0)
    k_in, k_param = jax.random.split(key)

    # Small shapes consistent with the module: batch=2, in_chans=1,
    # spatial 16^3 with patch 8 -> 2x2x2 = 8 patches, embed_dim=128.
    N, C, S = 2, 1, 16
    patch = 8
    embed_dim = 128

    x = jax.random.normal(k_in, (N, C, S, S, S), jnp.float32)      # NCDHW

    module = PatchEmbedPallas(img_size=S, patch_size=patch, in_chans=C,
                              embed_dim=embed_dim, key=k_param)

    out = jax.block_until_ready(module(x))
    assert out.shape == (N, module.num_patches, embed_dim)
    assert out.dtype == x.dtype

    # Reference 1: same bf16-cast inputs, f32 accumulation (matches the MXU path).
    x_p_bf = module._extract_patches(x.astype(jnp.bfloat16)).astype(jnp.float32)
    ref_bf = (x_p_bf @ module.w_mat_bf16.astype(jnp.float32) + module.bias
              ).reshape(N, module.num_patches, embed_dim)
    assert jnp.allclose(out, ref_bf, atol=2e-2, rtol=2e-2)

    # Reference 2: full-f32 Conv3d-equivalent math (loose tol for the bf16 cast).
    x_p_f32 = module._extract_patches(x)
    ref_f32 = (x_p_f32 @ module.w_mat + module.bias
               ).reshape(N, module.num_patches, embed_dim)
    assert jnp.allclose(out, ref_f32, atol=1e-1, rtol=1e-1)

    print("KERNEL_OK")
</pallas_src>

<mosaic_0001>
module attributes {stable_mosaic.version = 11 : i64} {
  func.func @_pe_kernel_resident(%arg0: i32, %arg1: memref<16x512xbf16, #tpu.memory_space<vmem>>, %arg2: memref<512x128xbf16, #tpu.memory_space<vmem>>, %arg3: memref<1x128xf32, #tpu.memory_space<vmem>>, %arg4: memref<16x128xf32, #tpu.memory_space<vmem>>) attributes {dimension_semantics = [#tpu.dimension_semantics<parallel>], iteration_bounds = array<i64: 1>, scalar_prefetch = 0 : i64, scratch_operands = 0 : i64, tpu.core_type = #tpu.core_type<tc>, window_params = [{transform_indices = @transform_0, window_bounds = array<i64: 16, 512>}, {pipeline_mode = #tpu.pipeline_mode<synchronous>, transform_indices = @transform_1, window_bounds = array<i64: 512, 128>}, {pipeline_mode = #tpu.pipeline_mode<synchronous>, transform_indices = @transform_2, window_bounds = array<i64: 1, 128>}, {transform_indices = @transform_3, window_bounds = array<i64: 16, 128>}]} {
    %c0 = arith.constant 0 : index
    %c0_0 = arith.constant 0 : index
    %0 = vector.load %arg1[%c0, %c0_0] : memref<16x512xbf16, #tpu.memory_space<vmem>>, vector<16x512xbf16>
    %c0_1 = arith.constant 0 : index
    %c0_2 = arith.constant 0 : index
    %1 = vector.load %arg2[%c0_1, %c0_2] : memref<512x128xbf16, #tpu.memory_space<vmem>>, vector<512x128xbf16>
    %cst = arith.constant dense<0.000000e+00> : vector<16x128xf32>
    %2 = tpu.matmul %0, %1, %cst {dimension_numbers = #tpu.dot_dimension_numbers<[1], [0], [0], [1], [0, 0, 1, 1], [], []>} : vector<16x512xbf16>, vector<512x128xbf16>, vector<16x128xf32> -> vector<16x128xf32>
    %c0_3 = arith.constant 0 : index
    %c0_4 = arith.constant 0 : index
    %3 = vector.load %arg3[%c0_3, %c0_4] : memref<1x128xf32, #tpu.memory_space<vmem>>, vector<1x128xf32>
    %4 = vector.broadcast %3 : vector<1x128xf32> to vector<16x128xf32>
    %5 = arith.addf %2, %4 : vector<16x128xf32>
    %c0_5 = arith.constant 0 : index
    %c0_6 = arith.constant 0 : index
    %6 = vector.load %arg4[%c0_5, %c0_6] : memref<16x128xf32, #tpu.memory_space<vmem>>, vector<16x128xf32>
    tpu.vector_store %arg4[%c0_5, %c0_6], %5 {strides = array<i32>} : memref<16x128xf32, #tpu.memory_space<vmem>>, vector<16x128xf32>,
    return
  }
  func.func @transform_0(%arg0: i32) -> (i32, i32) {
    %c0_i32 = arith.constant 0 : i32
    %c0_i32_0 = arith.constant 0 : i32
    return %arg0, %c0_i32 : i32, i32
  }
  func.func @transform_1(%arg0: i32) -> (i32, i32) {
    %c0_i32 = arith.constant 0 : i32
    %c0_i32_0 = arith.constant 0 : i32
    %c0_i32_1 = arith.constant 0 : i32
    return %c0_i32, %c0_i32_0 : i32, i32
  }
  func.func @transform_2(%arg0: i32) -> (i32, i32) {
    %c0_i32 = arith.constant 0 : i32
    %c0_i32_0 = arith.constant 0 : i32
    %c0_i32_1 = arith.constant 0 : i32
    return %c0_i32, %c0_i32_0 : i32, i32
  }
  func.func @transform_3(%arg0: i32) -> (i32, i32) {
    %c0_i32 = arith.constant 0 : i32
    %c0_i32_0 = arith.constant 0 : i32
    return %arg0, %c0_i32 : i32, i32
  }
}

</mosaic_0001>

<llo_original>
// kernel: a_call__.1
$region0: #{a_call__.1}
  #allocation0 [shape = 'u32[]', space=smem, size = 0x4, offset = 0x4, fixed_abs, tag = 'smem constant byte address 0x4 - core index']
  #allocation1 [shape = 'u32[72,128]{1,0:T(1,128)}', space=vmem, size = 0x9000, scoped, tag = 'internal scratch']
  %s0 = inlined_call_operand.vmem [shape: bf16[16,512], index: 0, kind: input, shape index: {}]
  %s1 = inlined_call_operand.vmem [shape: bf16[512,128], index: 1, kind: input, shape index: {}]
  %s2 = inlined_call_operand.vmem [shape: f32[1,128], index: 2, kind: input, shape index: {}]
  %s3 = inlined_call_operand.hbm [shape: f32[16,128], index: 3, kind: output, shape index: {}]
  %s4 = sld [smem:[#allocation0]]
  $region22: #{a_call__.1} parent=0
    _
  %s6 = ssub.s32 1, %s4
  %s7 = scalar_select 0, %s6, %s4
  $region1: #{a_call__.1} parent=0
    #allocation2 [shape = 'u8[8192]{0}', space=vmem, size = 0x2000, scoped, tag = 'output window, operand 0, single buffered']
    #allocation3 [shape = 's32[1]{0}', space=sflag, size = 0x4, scoped, tag = 'scoped memory for a_call__.1']
    %8 = vsyncpa [#allocation3], 0
    // Predicated region
    $region2: #{a_call__.1} parent=1 // pred_check
      _
    $region3: #{a_call__.1} parent=1 // pred_check_branch
      %10 = sbr.rel (0) target = $region5
    $region4: #{a_call__.1} parent=1 // pred_region
      _
    $region5: #{a_call__.1} parent=1 // pred_fallthru
      _
    // Predicated region
    $region6: #{a_call__.1} parent=1 // pred_check
      _
    $region7: #{a_call__.1} parent=1 // pred_check_branch
      %12 = sbr.rel (0) target = $region9
    $region8: #{a_call__.1} parent=1 // pred_region
      _
    $region9: #{a_call__.1} parent=1 // pred_fallthru
      _
    // Predicated region
    $region10: #{a_call__.1} parent=1 // pred_check
      _
    $region11: #{a_call__.1} parent=1 // pred_check_branch
      %14 = sbr.rel (0) target = $region13
    $region12: #{a_call__.1} parent=1 // pred_region
      _
    $region13: #{a_call__.1} parent=1 // pred_fallthru
      _
    %v15 = vld [vmem:[%s0] sm:$0xff]
    %v16 = vld [vmem:[%s0 + $0x8] sm:$0xff]
    %v17 = vld [vmem:[%s0 + $0x10] sm:$0xff]
    %v18 = vld [vmem:[%s0 + $0x18] sm:$0xff]
    %v19 = vld [vmem:[%s1] sm:$0xf]
    %v20 = vld [vmem:[%s1 + $0x4] sm:$0xf]
    %v21 = vld [vmem:[%s1 + $0x8] sm:$0xf]
    %v22 = vld [vmem:[%s1 + $0xc] sm:$0xf]
    %v23 = vld [vmem:[%s1 + $0x10] sm:$0xf]
    %v24 = vld [vmem:[%s1 + $0x14] sm:$0xf]
    %v25 = vld [vmem:[%s1 + $0x18] sm:$0xf]
    %v26 = vld [vmem:[%s1 + $0x1c] sm:$0xf]
    %v27 = vld [vmem:[%s1 + $0x20] sm:$0xf]
    %v28 = vld [vmem:[%s1 + $0x24] sm:$0xf]
    %v29 = vld [vmem:[%s1 + $0x28] sm:$0xf]
    %v30 = vld [vmem:[%s1 + $0x2c] sm:$0xf]
    %v31 = vld [vmem:[%s1 + $0x30] sm:$0xf]
    %v32 = vld [vmem:[%s1 + $0x34] sm:$0xf]
    %v33 = vld [vmem:[%s1 + $0x38] sm:$0xf]
    %v34 = vld [vmem:[%s1 + $0x3c] sm:$0xf]
    %v35 = vld [vmem:[%s1 + $0x40] sm:$0xf]
    %v36 = vld [vmem:[%s1 + $0x44] sm:$0xf]
    %v37 = vld [vmem:[%s1 + $0x48] sm:$0xf]
    %v38 = vld [vmem:[%s1 + $0x4c] sm:$0xf]
    %v39 = vld [vmem:[%s1 + $0x50] sm:$0xf]
    %v40 = vld [vmem:[%s1 + $0x54] sm:$0xf]
    %v41 = vld [vmem:[%s1 + $0x58] sm:$0xf]
    %v42 = vld [vmem:[%s1 + $0x5c] sm:$0xf]
    %v43 = vld [vmem:[%s1 + $0x60] sm:$0xf]
    %v44 = vld [vmem:[%s1 + $0x64] sm:$0xf]
    %v45 = vld [vmem:[%s1 + $0x68] sm:$0xf]
    %v46 = vld [vmem:[%s1 + $0x6c] sm:$0xf]
    %v47 = vld [vmem:[%s1 + $0x70] sm:$0xf]
    %v48 = vld [vmem:[%s1 + $0x74] sm:$0xf]
    %v49 = vld [vmem:[%s1 + $0x78] sm:$0xf]
    %v50 = vld [vmem:[%s1 + $0x7c] sm:$0xf]
    %v51 = vld [vmem:[%s1 + $0x80] sm:$0xf]
    %v52 = vld [vmem:[%s1 + $0x84] sm:$0xf]
    %v53 = vld [vmem:[%s1 + $0x88] sm:$0xf]
    %v54 = vld [vmem:[%s1 + $0x8c] sm:$0xf]
    %v55 = vld [vmem:[%s1 + $0x90] sm:$0xf]
    %v56 = vld [vmem:[%s1 + $0x94] sm:$0xf]
    %v57 = vld [vmem:[%s1 + $0x98] sm:$0xf]
    %v58 = vld [vmem:[%s1 + $0x9c] sm:$0xf]
    %v59 = vld [vmem:[%s1 + $0xa0] sm:$0xf]
    %v60 = vld [vmem:[%s1 + $0xa4] sm:$0xf]
    %v61 = vld [vmem:[%s1 + $0xa8] sm:$0xf]
    %v62 = vld [vmem:[%s1 + $0xac] sm:$0xf]
    %v63 = vld [vmem:[%s1 + $0xb0] sm:$0xf]
    %v64 = vld [vmem:[%s1 + $0xb4] sm:$0xf]
    %v65 = vld [vmem:[%s1 + $0xb8] sm:$0xf]
    %v66 = vld [vmem:[%s1 + $0xbc] sm:$0xf]
    %v67 = vld [vmem:[%s1 + $0xc0] sm:$0xf]
    %v68 = vld [vmem:[%s1 + $0xc4] sm:$0xf]
    %v69 = vld [vmem:[%s1 + $0xc8] sm:$0xf]
    %v70 = vld [vmem:[%s1 + $0xcc] sm:$0xf]
    %v71 = vld [vmem:[%s1 + $0xd0] sm:$0xf]
    %v72 = vld [vmem:[%s1 + $0xd4] sm:$0xf]
    %v73 = vld [vmem:[%s1 + $0xd8] sm:$0xf]
    %v74 = vld [vmem:[%s1 + $0xdc] sm:$0xf]
    %v75 = vld [vmem:[%s1 + $0xe0] sm:$0xf]
    %v76 = vld [vmem:[%s1 + $0xe4] sm:$0xf]
    %v77 = vld [vmem:[%s1 + $0xe8] sm:$0xf]
    %v78 = vld [vmem:[%s1 + $0xec] sm:$0xf]
    %v79 = vld [vmem:[%s1 + $0xf0] sm:$0xf]
    %v80 = vld [vmem:[%s1 + $0xf4] sm:$0xf]
    %v81 = vld [vmem:[%s1 + $0xf8] sm:$0xf]
    %v82 = vld [vmem:[%s1 + $0xfc] sm:$0xf]
    %v83 = vld [vmem:[%s2] sm:$0x1]
    %v85 = vperm.slane %v83, 0
    %v91 = vunpack.c.l.b16 %v15
    %v92 = vunpack.c.h.b16 %v15
    %v93 = vunpack.c.l.b16 %v16
    %v94 = vunpack.c.h.b16 %v16
    %v95 = vunpack.c.l.b16 %v17
    %v96 = vunpack.c.h.b16 %v17
    %v97 = vunpack.c.l.b16 %v18
    %v98 = vunpack.c.h.b16 %v18
    %v99 = vpack.c.b16 %v95, %v91
    %v100 = vpack.c.b16 %v96, %v92
    %v101 = vpack.c.b16 %v97, %v93
    %v102 = vpack.c.b16 %v98, %v94
    %v171 = vunpack.c.l.b16 %v19
    %v172 = vunpack.c.l.b16 %v20
    %v173 = vunpack.c.l.b16 %v21
    %v174 = vunpack.c.l.b16 %v22
    %v175 = vunpack.c.l.b16 %v23
    %v176 = vunpack.c.l.b16 %v24
    %v177 = vunpack.c.l.b16 %v25
    %v178 = vunpack.c.l.b16 %v26
    %v179 = vunpack.c.l.b16 %v27
    %v180 = vunpack.c.l.b16 %v28
    %v181 = vunpack.c.l.b16 %v29
    %v182 = vunpack.c.l.b16 %v30
    %v183 = vunpack.c.l.b16 %v31
    %v184 = vunpack.c.l.b16 %v32
    %v185 = vunpack.c.l.b16 %v33
    %v186 = vunpack.c.l.b16 %v34
    %v187 = vunpack.c.l.b16 %v35
    %v188 = vunpack.c.l.b16 %v36
    %v189 = vunpack.c.l.b16 %v37
    %v190 = vunpack.c.l.b16 %v38
    %v191 = vunpack.c.l.b16 %v39
    %v192 = vunpack.c.l.b16 %v40
    %v193 = vunpack.c.l.b16 %v41
    %v194 = vunpack.c.l.b16 %v42
    %v195 = vunpack.c.l.b16 %v43
    %v196 = vunpack.c.l.b16 %v44
    %v197 = vunpack.c.l.b16 %v45
    %v198 = vunpack.c.l.b16 %v46
    %v199 = vunpack.c.l.b16 %v47
    %v200 = vunpack.c.l.b16 %v48
    %v201 = vunpack.c.l.b16 %v49
    %v202 = vunpack.c.l.b16 %v50
    %v203 = vunpack.c.l.b16 %v51
    %v204 = vunpack.c.l.b16 %v52
    %v205 = vunpack.c.l.b16 %v53
    %v206 = vunpack.c.l.b16 %v54
    %v207 = vunpack.c.l.b16 %v55
    %v208 = vunpack.c.l.b16 %v56
    %v209 = vunpack.c.l.b16 %v57
    %v210 = vunpack.c.l.b16 %v58
    %v211 = vunpack.c.l.b16 %v59
    %v212 = vunpack.c.l.b16 %v60
    %v213 = vunpack.c.l.b16 %v61
    %v214 = vunpack.c.l.b16 %v62
    %v215 = vunpack.c.l.b16 %v63
    %v216 = vunpack.c.l.b16 %v64
    %v217 = vunpack.c.l.b16 %v65
    %v218 = vunpack.c.l.b16 %v66
    %v219 = vunpack.c.l.b16 %v67
    %v220 = vunpack.c.l.b16 %v68
    %v221 = vunpack.c.l.b16 %v69
    %v222 = vunpack.c.l.b16 %v70
    %v223 = vunpack.c.l.b16 %v71
    %v224 = vunpack.c.l.b16 %v72
    %v225 = vunpack.c.l.b16 %v73
    %v226 = vunpack.c.l.b16 %v74
    %v227 = vunpack.c.l.b16 %v75
    %v228 = vunpack.c.l.b16 %v76
    %v229 = vunpack.c.l.b16 %v77
    %v230 = vunpack.c.l.b16 %v78
    %v231 = vunpack.c.l.b16 %v79
    %v232 = vunpack.c.l.b16 %v80
    %v233 = vunpack.c.l.b16 %v81
    %v234 = vunpack.c.l.b16 %v82
    %v235 = vpack.c.b16 %v172, %v171
    %v236 = vpack.c.b16 %v174, %v173
    %v237 = vpack.c.b16 %v176, %v175
    %v238 = vpack.c.b16 %v178, %v177
    %v239 = vpack.c.b16 %v180, %v179
    %v240 = vpack.c.b16 %v182, %v181
    %v241 = vpack.c.b16 %v184, %v183
    %v242 = vpack.c.b16 %v186, %v185
    %v243 = vpack.c.b16 %v188, %v187
    %v244 = vpack.c.b16 %v190, %v189
    %v245 = vpack.c.b16 %v192, %v191
    %v246 = vpack.c.b16 %v194, %v193
    %v247 = vpack.c.b16 %v196, %v195
    %v248 = vpack.c.b16 %v198, %v197
    %v249 = vpack.c.b16 %v200, %v199
    %v250 = vpack.c.b16 %v202, %v201
    %v251 = vpack.c.b16 %v204, %v203
    %v252 = vpack.c.b16 %v206, %v205
    %v253 = vpack.c.b16 %v208, %v207
    %v254 = vpack.c.b16 %v210, %v209
    %v255 = vpack.c.b16 %v212, %v211
    %v256 = vpack.c.b16 %v214, %v213
    %v257 = vpack.c.b16 %v216, %v215
    %v258 = vpack.c.b16 %v218, %v217
    %v259 = vpack.c.b16 %v220, %v219
    %v260 = vpack.c.b16 %v222, %v221
    %v261 = vpack.c.b16 %v224, %v223
    %v262 = vpack.c.b16 %v226, %v225
    %v263 = vpack.c.b16 %v228, %v227
    %v264 = vpack.c.b16 %v230, %v229
    %v265 = vpack.c.b16 %v232, %v231
    %v266 = vpack.c.b16 %v234, %v233
    %299 = vmatpush.bf16.msra.mxu0 %v242
    %300 = vmatpush.bf16.msra.mxu0 %v241
    %301 = vmatpush.bf16.msra.mxu0 %v240
    %302 = vmatpush.bf16.msra.mxu0 %v239
    %303 = vmatpush.bf16.msra.mxu0 %v238
    %304 = vmatpush.bf16.msra.mxu0 %v237
    %305 = vmatpush.bf16.msra.mxu0 %v236
    %306 = vmatpush.bf16.msra.mxu0 %v235
    %307 = vmatmul.bf16.gmra.mxu0 %v99
    %v308 = vpop.f32.mrf.mxu0
    %v309 = vadd.f32 %v85, %v308
    %v310 = vpop.f32.mrf.mxu0
    %v311 = vadd.f32 %v85, %v310
    %312 = vdwg.mxu0
    %313 = vmatpush.bf16.msra.mxu0 %v250
    %314 = vmatpush.bf16.msra.mxu0 %v249
    %315 = vmatpush.bf16.msra.mxu0 %v248
    %316 = vmatpush.bf16.msra.mxu0 %v247
    %317 = vmatpush.bf16.msra.mxu0 %v246
    %318 = vmatpush.bf16.msra.mxu0 %v245
    %319 = vmatpush.bf16.msra.mxu0 %v244
    %320 = vmatpush.bf16.msra.mxu0 %v243
    %321 = vmatmul.bf16.gmra.mxu0 %v100
    %v322 = vpop.f32.mrf.mxu0
    %v323 = vadd.f32 %v309, %v322
    %v324 = vpop.f32.mrf.mxu0
    %v325 = vadd.f32 %v311, %v324
    %326 = vdwg.mxu0
    %327 = vmatpush.bf16.msra.mxu0 %v258
    %328 = vmatpush.bf16.msra.mxu0 %v257
    %329 = vmatpush.bf16.msra.mxu0 %v256
    %330 = vmatpush.bf16.msra.mxu0 %v255
    %331 = vmatpush.bf16.msra.mxu0 %v254
    %332 = vmatpush.bf16.msra.mxu0 %v253
    %333 = vmatpush.bf16.msra.mxu0 %v252
    %334 = vmatpush.bf16.msra.mxu0 %v251
    %335 = vmatmul.bf16.gmra.mxu0 %v101
    %v336 = vpop.f32.mrf.mxu0
    %v337 = vadd.f32 %v323, %v336
    %v338 = vpop.f32.mrf.mxu0
    %v339 = vadd.f32 %v325, %v338
    %340 = vdwg.mxu0
    %341 = vmatpush.bf16.msra.mxu0 %v266
    %342 = vmatpush.bf16.msra.mxu0 %v265
    %343 = vmatpush.bf16.msra.mxu0 %v264
    %344 = vmatpush.bf16.msra.mxu0 %v263
    %345 = vmatpush.bf16.msra.mxu0 %v262
    %346 = vmatpush.bf16.msra.mxu0 %v261
    %347 = vmatpush.bf16.msra.mxu0 %v260
    %348 = vmatpush.bf16.msra.mxu0 %v259
    %349 = vmatmul.bf16.gmra.mxu0 %v102
    %v350 = vpop.f32.mrf.mxu0
    %v351 = vadd.f32 %v337, %v350
    %v352 = vpop.f32.mrf.mxu0
    %v353 = vadd.f32 %v339, %v352
    %354 = vdwg.mxu0
    %355 = vst [vmem:[#allocation2] sm:$0xff] %v351
    %356 = vst [vmem:[#allocation2 + $0x8] sm:$0xff] %v353
    // Predicated region
    $region14: #{a_call__.1} parent=1 // pred_check
      _
    $region15: #{a_call__.1} parent=1 // pred_check_branch
      %358 = sbr.rel (0) target = $region17
    $region16: #{a_call__.1} parent=1 // pred_region
      %360 = vsyncadd [#allocation3], 0
      %s361 = sshll.u32 [#allocation2], 4
      %s362 = int_to_ptr.vmem [resolvable:$true] %s361
      %s363 = sshll.u32 %s3, 4
      %s364 = int_to_ptr.hbm [resolvable:$true] %s363
      %369 = dma.vmem_to_hbm [thread:$0]  %s362, 256, %s364, [#allocation3], 128, 128, 8
    $region17: #{a_call__.1} parent=1 // pred_fallthru
      _
    // Predicated region
    $region18: #{a_call__.1} parent=1 // pred_check
      _
    $region19: #{a_call__.1} parent=1 // pred_check_branch
      %371 = sbr.rel (0) target = $region21
    $region20: #{a_call__.1} parent=1 // pred_region
      %373 = dma.done [#allocation3], 256
    $region21: #{a_call__.1} parent=1 // pred_fallthru
      _
    %374 = vsyncpa [#allocation3], 1

</llo_original>
